<compile_context>
chip_gen: v6e
topology: v6e:2x2x1
jax: 0.10.0
libtpu: 0.0.40
codegen_flags: <defaults>
</compile_context>

<pallas_src>
import jax
import jax.numpy as jnp
from jax.experimental import pallas as pl
from jax.experimental.pallas import tpu as pltpu


POWER = 2  # matches Normalize(power=2)

_LANE = 128
# Per-block VMEM budget for the REAL footprint of one grid step:
# input block + output block (sublane/lane padded) + f32 upcast temp (non-f32 input).
# 8 MiB => ~4 MiB per I/O array for f32; with double buffering + elementwise temps the
# steady state stays comfortably under the 48 MiB scoped-VMEM limit set below.
_BLOCK_BYTES_BUDGET = 8 * 1024 * 1024
# Don't shrink blocks below this when splitting for megacore parallelism.
_MIN_BLOCK_BYTES = 1 * 1024 * 1024
# Explicit scoped-VMEM limit: <= physical on every generation (v5e/v6e 128 MiB,
# v7x 64 MiB) with headroom for Mosaic-internal scratch.
_VMEM_LIMIT_BYTES = 48 * 1024 * 1024


def _round_up(a: int, b: int) -> int:
    return ((a + b - 1) // b) * b


def _normalize_kernel(x_ref, o_ref):
    # Block shape: (nb, C, thw) -- channels on sublanes (axis 1), spatial on lanes.
    x = x_ref[...]
    if x.dtype != jnp.float32:
        x = x.astype(jnp.float32)
    # power == 2: sum of squares over channels (sublane reduce -> XLU), then
    # x * rsqrt(sum) (rsqrt -> EUP, mul -> VPU).  The kernel is purely HBM-bound,
    # so all these units have huge slack; compute stays simple on purpose.
    s = jnp.sum(x * x, axis=1, keepdims=True)          # (nb, 1, thw)
    inv_norm = jax.lax.rsqrt(s)                        # == 1 / norm
    # NOTE: like the PyTorch module (no eps clamp), an all-zero channel column
    # yields NaN exactly as x.div(norm) would.
    o_ref[...] = (x * inv_norm).astype(o_ref.dtype)


def normalize(x: jax.Array) -> jax.Array:
    """L2-normalize over dim 1 of an NCHW tensor, like PyTorch `Normalize(power=2)`."""
    N, C, H, W = x.shape
    HW = H * W
    itemsize = jnp.dtype(x.dtype).itemsize

    # --- real per-lane footprint of one batch row of a block -------------------
    # VMEM tiles pad the second-minor dim to the dtype's sublane multiple.
    sublane = max(8, 32 // itemsize)            # 8 (f32), 16 (bf16/f16), 32 (int8/fp8)
    c_pad = _round_up(C, sublane)
    bytes_per_lane_row = 2 * c_pad * itemsize   # input block + output block
    if itemsize != 4:
        bytes_per_lane_row += _round_up(C, 8) * 4   # live f32 upcast of the block

    # --- block budget: cap so tensors > ~couple MiB get >= ~4 grid steps -------
    approx_total = N * c_pad * _round_up(HW, _LANE) * itemsize * 2
    budget = min(_BLOCK_BYTES_BUDGET, max(_MIN_BLOCK_BYTES, approx_total // 4))

    # --- spatial tile: lane-dense multiple of 128, ragged last block -----------
    max_lanes = max(_LANE, (budget // bytes_per_lane_row) // _LANE * _LANE)
    if HW <= max_lanes:
        thw = HW                      # single spatial block == full dim (allowed
        grid_s = 1                    # even when HW % 128 != 0)
    else:
        thw = max_lanes               # multiple of 128; last block may be ragged:
        grid_s = pl.cdiv(HW, thw)     # OOB lanes read garbage, their writes drop
    thw_lanes = _round_up(thw, _LANE)

    # --- batch fold: as many rows per block as fit; no exact-divisor constraint -
    nb = max(1, min(N, budget // (bytes_per_lane_row * thw_lanes)))
    grid_n = pl.cdiv(N, nb)           # ragged last batch block handled by Pallas

    x_flat = x.reshape(N, C, HW)      # free (collapses contiguous trailing dims)

    out_flat = pl.pallas_call(
        _normalize_kernel,
        out_shape=jax.ShapeDtypeStruct((N, C, HW), x.dtype),
        grid_spec=pltpu.PrefetchScalarGridSpec(
            num_scalar_prefetch=0,
            grid=(grid_n, grid_s),
            in_specs=[pl.BlockSpec((nb, C, thw), lambda n, s: (n, 0, s))],
            out_specs=pl.BlockSpec((nb, C, thw), lambda n, s: (n, 0, s)),
        ),
        compiler_params=pltpu.CompilerParams(
            dimension_semantics=("parallel", "parallel"),
            vmem_limit_bytes=_VMEM_LIMIT_BYTES,
        ),
    )(x_flat)

    return out_flat.reshape(N, C, H, W)   # free reshape back to NCHW


def _reference(x):
    norm = jnp.power(jnp.sum(jnp.power(x, POWER), axis=1, keepdims=True), 1.0 / POWER)
    return x / norm


def _check(x):
    out = jax.block_until_ready(normalize(x))
    ref = _reference(x)
    assert out.shape == x.shape and out.dtype == x.dtype
    assert jnp.allclose(out, ref, atol=1e-5, rtol=1e-5), "mismatch vs reference"


if __name__ == "__main__":
    key = jax.random.PRNGKey(0)
    k0, k1, k2 = jax.random.split(key, 3)

    # primary small NCHW input consistent with typical use of this layer
    _check(jax.random.normal(k0, (2, 4, 16, 16), dtype=jnp.float32))
    # non-128-multiple spatial extent (no wrapper padding, full-dim block)
    _check(jax.random.normal(k1, (3, 5, 10, 13), dtype=jnp.float32))
    # larger-C shape that exercises the ragged multi-block spatial path
    _check(jax.random.normal(k2, (1, 512, 20, 20), dtype=jnp.float32))

    print("KERNEL_OK")
</pallas_src>

<mosaic_0001>
module attributes {stable_mosaic.version = 11 : i64} {
  func.func @_normalize_kernel(%arg0: i32, %arg1: i32, %arg2: memref<2x4x256xf32, #tpu.memory_space<vmem>>, %arg3: memref<2x4x256xf32, #tpu.memory_space<vmem>>) attributes {dimension_semantics = [#tpu.dimension_semantics<parallel>, #tpu.dimension_semantics<parallel>], iteration_bounds = array<i64: 1, 1>, scalar_prefetch = 0 : i64, scratch_operands = 0 : i64, tpu.core_type = #tpu.core_type<tc>, window_params = [{transform_indices = @transform_0, window_bounds = array<i64: 2, 4, 256>}, {transform_indices = @transform_1, window_bounds = array<i64: 2, 4, 256>}]} {
    %c0 = arith.constant 0 : index
    %c0_0 = arith.constant 0 : index
    %c0_1 = arith.constant 0 : index
    %0 = vector.load %arg2[%c0, %c0_0, %c0_1] : memref<2x4x256xf32, #tpu.memory_space<vmem>>, vector<2x4x256xf32>
    %1 = arith.mulf %0, %0 : vector<2x4x256xf32>
    %cst = arith.constant dense<0.000000e+00> : vector<2x256xf32>
    %2 = vector.multi_reduction <add>, %1, %cst [1] : vector<2x4x256xf32> to vector<2x256xf32>
    %3 = vector.shape_cast %2 : vector<2x256xf32> to vector<2x1x256xf32>
    %4 = math.rsqrt %3 : vector<2x1x256xf32>
    %5 = vector.broadcast %4 : vector<2x1x256xf32> to vector<2x4x256xf32>
    %6 = arith.mulf %0, %5 : vector<2x4x256xf32>
    %c0_2 = arith.constant 0 : index
    %c0_3 = arith.constant 0 : index
    %c0_4 = arith.constant 0 : index
    %7 = vector.load %arg3[%c0_2, %c0_3, %c0_4] : memref<2x4x256xf32, #tpu.memory_space<vmem>>, vector<2x4x256xf32>
    tpu.vector_store %arg3[%c0_2, %c0_3, %c0_4], %6 {strides = array<i32>} : memref<2x4x256xf32, #tpu.memory_space<vmem>>, vector<2x4x256xf32>,
    return
  }
  func.func @transform_0(%arg0: i32, %arg1: i32) -> (i32, i32, i32) {
    %c0_i32 = arith.constant 0 : i32
    %c0_i32_0 = arith.constant 0 : i32
    return %arg0, %c0_i32, %arg1 : i32, i32, i32
  }
  func.func @transform_1(%arg0: i32, %arg1: i32) -> (i32, i32, i32) {
    %c0_i32 = arith.constant 0 : i32
    %c0_i32_0 = arith.constant 0 : i32
    return %arg0, %c0_i32, %arg1 : i32, i32, i32
  }
}

</mosaic_0001>

<llo_original>
// kernel: tpu_custom_call.1
$region0: #{tpu_custom_call.1}
  #allocation0 [shape = 'u32[]', space=smem, size = 0x4, offset = 0x4, fixed_abs, tag = 'smem constant byte address 0x4 - core index']
  #allocation1 [shape = 'u32[144,128]{1,0:T(1,128)}', space=vmem, size = 0x12000, scoped, tag = 'internal scratch']
  %s0 = inlined_call_operand.hbm [shape: f32[2,4,256], index: 0, kind: input, shape index: {}]
  %s1 = inlined_call_operand.hbm [shape: f32[2,4,256], index: 1, kind: output, shape index: {}]
  %s2 = sld [smem:[#allocation0]]
  $region18: #{tpu_custom_call.1} parent=0
    _
  %s4 = ssub.s32 1, %s2
  %s5 = scalar_select 0, %s4, %s2
  $region1: #{tpu_custom_call.1} parent=0
    #allocation2 [shape = 'u8[8192]{0}', space=vmem, size = 0x2000, scoped, tag = 'input window, operand 0, single buffered']
    #allocation3 [shape = 's32[1]{0}', space=sflag, size = 0x4, scoped, tag = 'scoped memory for tpu_custom_call.1']
    #allocation4 [shape = 's32[1]{0}', space=sflag, size = 0x4, scoped, tag = 'scoped memory for tpu_custom_call.1']
    #allocation5 [shape = 'u8[8192]{0}', space=vmem, size = 0x2000, scoped, tag = 'output window, operand 0, single buffered']
    %6 = vsyncpa [#allocation3], 0
    %7 = vsyncpa [#allocation4], 0
    // Predicated region
    $region2: #{tpu_custom_call.1} parent=1 // pred_check
      _
    $region3: #{tpu_custom_call.1} parent=1 // pred_check_branch
      %9 = sbr.rel (0) target = $region5
    $region4: #{tpu_custom_call.1} parent=1 // pred_region
      %s11 = ssub.s32 256, 256
      %12 = vsyncadd [#allocation3], %s11
      %s13 = sshll.u32 [#allocation2], 4
      %s14 = int_to_ptr.vmem [resolvable:$true] %s13
      %19 = dma.hbm_to_vmem [thread:$0]  %s0, 256, %s14, [#allocation3], 128, 128, 8
    $region5: #{tpu_custom_call.1} parent=1 // pred_fallthru
      _
    // Predicated region
    $region6: #{tpu_custom_call.1} parent=1 // pred_check
      _
    $region7: #{tpu_custom_call.1} parent=1 // pred_check_branch
      %21 = sbr.rel (0) target = $region9
    $region8: #{tpu_custom_call.1} parent=1 // pred_region
      %22 = dma.done [#allocation3], 256
    $region9: #{tpu_custom_call.1} parent=1 // pred_fallthru
      _
    %v23 = vld [vmem:[#allocation2] sm:$0xff]
    %v24 = vld [vmem:[#allocation2 + $0x8] sm:$0xff]
    %v25 = vmul.f32 %v23, %v23
    %v26 = vmul.f32 %v24, %v24
    %v29 = vcombine.high %v25, %v25
    %v30 = vcombine.high %v26, %v26
    %vm33 = vcmask 1043456
    %v34 = vsel %vm33, %v25, 0.0
    %v35 = vrot.slane %v34, 4
    %v36 = vadd.f32 %v34, %v35
    %v37 = vrot.slane %v36, 2
    %v38 = vadd.f32 %v36, %v37
    %v39 = vrot.slane %v38, 1
    %v40 = vadd.f32 %v38, %v39
    %v41 = vsel %vm33, %v29, 0.0
    %v42 = vrot.slane %v41, 4
    %v43 = vadd.f32 %v41, %v42
    %v44 = vrot.slane %v43, 2
    %v45 = vadd.f32 %v43, %v44
    %v46 = vrot.slane %v45, 1
    %v47 = vadd.f32 %v45, %v46
    %v48 = vsel %vm33, %v26, 0.0
    %v49 = vrot.slane %v48, 4
    %v50 = vadd.f32 %v48, %v49
    %v51 = vrot.slane %v50, 2
    %v52 = vadd.f32 %v50, %v51
    %v53 = vrot.slane %v52, 1
    %v54 = vadd.f32 %v52, %v53
    %v55 = vsel %vm33, %v30, 0.0
    %v56 = vrot.slane %v55, 4
    %v57 = vadd.f32 %v55, %v56
    %v58 = vrot.slane %v57, 2
    %v59 = vadd.f32 %v57, %v58
    %v60 = vrot.slane %v59, 1
    %v61 = vadd.f32 %v59, %v60
    %v62 = vrsqrt.pop %v40
    %v63 = vrsqrt.pop %v47
    %v64 = vrsqrt.pop %v54
    %v65 = vrsqrt.pop %v61
    %v70 = vcombine.low %v62, %v63
    %v71 = vcombine.low %v64, %v65
    %v74 = vmul.f32 %v23, %v70
    %v75 = vmul.f32 %v24, %v71
    %76 = vst [vmem:[#allocation5] sm:$0xff] %v74
    %77 = vst [vmem:[#allocation5 + $0x8] sm:$0xff] %v75
    // Predicated region
    $region10: #{tpu_custom_call.1} parent=1 // pred_check
      _
    $region11: #{tpu_custom_call.1} parent=1 // pred_check_branch
      %79 = sbr.rel (0) target = $region13
    $region12: #{tpu_custom_call.1} parent=1 // pred_region
      %s81 = ssub.s32 256, 256
      %82 = vsyncadd [#allocation4], %s81
      %s83 = sshll.u32 [#allocation5], 4
      %s84 = int_to_ptr.vmem [resolvable:$true] %s83
      %89 = dma.vmem_to_hbm [thread:$0]  %s84, 256, %s1, [#allocation4], 128, 128, 8
    $region13: #{tpu_custom_call.1} parent=1 // pred_fallthru
      _
    // Predicated region
    $region14: #{tpu_custom_call.1} parent=1 // pred_check
      _
    $region15: #{tpu_custom_call.1} parent=1 // pred_check_branch
      %91 = sbr.rel (0) target = $region17
    $region16: #{tpu_custom_call.1} parent=1 // pred_region
      %92 = dma.done [#allocation4], 256
    $region17: #{tpu_custom_call.1} parent=1 // pred_fallthru
      _
    %93 = vsyncpa [#allocation3], 1
    %94 = vsyncpa [#allocation4], 1

</llo_original>
